<compile_context>
chip_gen: v5e
topology: v5e:2x2
jax: 0.10.0
libtpu: 0.0.40
codegen_flags: <defaults>
</compile_context>

<pallas_src>
import jax
import jax.numpy as jnp
from jax import lax
from jax.experimental import pallas as pl
from jax.experimental.pallas import tpu as pltpu


# Tap offsets (dh, dw) = (kh - 1, kw - 1), enumerated in t = kh*3 + kw order.
_TAPS = tuple((dh, dw) for dh in (-1, 0, 1) for dw in (-1, 0, 1))


def _round_up(x, m):
    return (x + m - 1) // m * m


def _make_kernel(nb, C, W, HW, Cp, Cm):
    """Kernel body for one grid step = one (nb, C, HW) slab of images."""

    def kernel(x_ref, scale_ref, shift_ref, w_ref, bias_ref, mask_ref, o_ref, stk_ref):
        # x_ref:     (nb, C, HW)   images (channels on sublanes, flat spatial on lanes)
        # scale_ref: (C, 1)        folded BN scale  = gamma / sqrt(var + eps)
        # shift_ref: (C, 1)        folded BN shift  = beta - mean * scale
        # w_ref:     (Cm, 9*Cp)    packed conv weights; column t*Cp + ci = w[co, ci, kh, kw]
        # bias_ref:  (C, 1)        conv bias
        # mask_ref:  (9, C, HW)    per-tap SAME-padding validity, pre-broadcast over channels
        # o_ref:     (nb, C, HW)
        # stk_ref:   (9*Cp, HW)    VMEM scratch: stacked tap operand for the MXU matmul

        # Hoisted once per grid step (shared by every image in the slab): three lane splats
        # + one small weight load.  Hoisting keeps broadcast_in_dim out of the image loop.
        scale = jnp.broadcast_to(scale_ref[...], (C, HW))
        shift = jnp.broadcast_to(shift_ref[...], (C, HW))
        bias = jnp.broadcast_to(bias_ref[...], (C, HW))
        wmat = w_ref[...]

        if Cp != C:
            # Rows [C, Cp) of each tap tile are never written below; keep them zeroed so the
            # zero-padded weight columns meet zeros rather than stale VMEM.  Re-done every
            # step because with megacore partitioning a core may never run program_id == 0.
            zpad = jnp.zeros((Cp - C, HW), stk_ref.dtype)
            for t in range(9):
                stk_ref[t * Cp + C:(t + 1) * Cp, :] = zpad

        @pl.loop(0, nb)
        def _(n):
            x_n = x_ref[n]                                            # (C, HW)
            # Folded BatchNorm + ReLU: dense VPU work.
            y = jnp.maximum(x_n.astype(jnp.float32) * scale + shift, 0.0)

            # Build the stacked (9*Cp, HW) tap operand: lane roll (XLU slot) + dense mask
            # multiply (VPU) + tile-aligned store (vst slot).  No sublane/lane broadcasts.
            for t, (dh, dw) in enumerate(_TAPS):
                d = dh * W + dw
                s = (-d) % HW
                ys = y if s == 0 else pltpu.roll(y, s, axis=1)
                if d != 0:
                    ys = ys * mask_ref[t]
                stk_ref[t * Cp:t * Cp + C, :] = ys.astype(stk_ref.dtype)

            # Whole 3x3 channel mix as one MXU matmul per image (f32 accumulate).
            z = jnp.dot(wmat, stk_ref[...], preferred_element_type=jnp.float32)

            # Conv bias + residual (residual uses the pre-BN input, PreAct style).
            o_ref[n] = (z[:C, :] + bias + x_n).astype(o_ref.dtype)

    return kernel


def _choose_nb(N, per_img_bytes, fixed_bytes, budget_bytes, slab_cap_bytes=4 << 20):
    """Images per grid step: largest divisor of N that (a) keeps the grid >= 2 when N >= 2 so
    both v7x TensorCores get work, (b) keeps the double-buffered x/out blocks plus constants
    inside the VMEM budget, and (c) keeps the activation slab below ~4 MiB so the pipeline
    still has several steps to overlap."""
    best = 1
    for d in range(1, N + 1):
        if N % d:
            continue
        if N >= 2 and N // d < 2:
            continue
        if fixed_bytes + 4 * d * per_img_bytes > budget_bytes:
            continue
        if d * per_img_bytes > slab_cap_bytes:
            continue
        best = max(best, d)
    return best


def preact_resnet_block(x_nchw, gamma, beta, conv_w, conv_b, eps=1e-5, images_per_step=None):
    """Forward pass of PreActResNetBlock.  x_nchw: (N, C, H, W); conv_w: (C, C, 3, 3)."""
    N, C, H, W = x_nchw.shape
    HW = H * W
    f32 = jnp.float32

    # ---- BatchNorm batch statistics (training mode, biased variance, like PyTorch) ----
    # TODO(synk): the (N, H, W) reduction spans every grid step, so it stays in XLA glue and is
    # folded into per-channel scale/shift; an eval-mode path would feed running stats here.
    mean = jnp.mean(x_nchw, axis=(0, 2, 3))
    var = jnp.var(x_nchw, axis=(0, 2, 3))
    scale = gamma.astype(f32) / jnp.sqrt(var.astype(f32) + eps)
    shift = beta.astype(f32) - mean.astype(f32) * scale

    # ---- free reshape only: (N, C, H, W) -> (N, C, HW); no transposes ----
    x3 = x_nchw.reshape(N, C, HW)

    # MXU operand dtype: bf16 inputs (f32 accumulate) once C fills the packed sublanes;
    # at tiny C it buys nothing, so stay f32 (exact).
    mm_dtype = jnp.bfloat16 if C >= 16 else f32
    mm_bytes = jnp.dtype(mm_dtype).itemsize

    # ---- pack conv weights for one (Cm, 9*Cp) x (9*Cp, HW) matmul per image ----
    Cp = _round_up(C, 8)   # contraction rows per tap (8-aligned stores / contraction dim)
    Cm = _round_up(C, 8)   # output rows (MXU-friendly M)
    w_perm = jnp.transpose(conv_w.astype(f32), (2, 3, 1, 0)).reshape(9, C, C)    # [t, ci, co]
    w_pad = jnp.zeros((9, Cp, Cm), f32).at[:, :C, :C].set(w_perm)
    w_l = w_pad.reshape(9 * Cp, Cm).T.astype(mm_dtype)                            # (Cm, 9*Cp)

    # ---- per-tap SAME-padding validity masks, pre-broadcast over channels ----
    p = jnp.arange(HW)
    hh, ww = p // W, p % W
    rows = []
    for dh, dw in _TAPS:
        rows.append((hh + dh >= 0) & (hh + dh < H) & (ww + dw >= 0) & (ww + dw < W))
    mask = jnp.stack(rows, axis=0).astype(f32)                    # (9, HW)
    mask = jnp.broadcast_to(mask[:, None, :], (9, C, HW))         # DMA'd once (constant index)
    # TODO(synk): for large C, regenerate the 4 edge rows in-kernel from an iota instead of
    # shipping the (9, C, HW) pre-broadcast tensor.

    # ---- images per grid step and VMEM budget (per-generation, not hard-coded) ----
    try:
        vmem_cap = int(pltpu.get_tpu_info().vmem_capacity_bytes)
    except Exception:
        vmem_cap = 64 * 1024 * 1024        # v7x physical VMEM — the smallest of v5e/v6e/v7x
    budget = int(vmem_cap * 0.4)           # ~25 MiB on v7x, ~51 MiB on v5e/v6e
    per_img = C * HW * x3.dtype.itemsize
    fixed = (2 * (3 * C * 4 + Cm * 9 * Cp * mm_bytes + 9 * C * HW * 4)   # double-buffered consts
             + 9 * Cp * HW * mm_bytes)                                    # stacked scratch
    nb = images_per_step if images_per_step is not None else _choose_nb(N, per_img, fixed, budget)
    assert N % nb == 0, "images_per_step must divide the batch"
    need = fixed + 4 * nb * per_img
    vmem_limit = int(min(max(budget, need + (2 << 20)), vmem_cap))

    kernel = _make_kernel(nb, C, W, HW, Cp, Cm)

    out3 = pl.pallas_call(
        kernel,
        out_shape=jax.ShapeDtypeStruct((N, C, HW), x3.dtype),
        grid_spec=pltpu.PrefetchScalarGridSpec(
            num_scalar_prefetch=0,
            grid=(N // nb,),
            in_specs=[
                pl.BlockSpec((nb, C, HW), lambda i: (i, 0, 0)),      # images
                pl.BlockSpec((C, 1), lambda i: (0, 0)),              # BN scale
                pl.BlockSpec((C, 1), lambda i: (0, 0)),              # BN shift
                pl.BlockSpec((Cm, 9 * Cp), lambda i: (0, 0)),        # packed conv weights
                pl.BlockSpec((C, 1), lambda i: (0, 0)),              # conv bias
                pl.BlockSpec((9, C, HW), lambda i: (0, 0, 0)),       # per-tap edge masks
            ],
            out_specs=pl.BlockSpec((nb, C, HW), lambda i: (i, 0, 0)),
            scratch_shapes=[pltpu.VMEM((9 * Cp, HW), mm_dtype)],
        ),
        compiler_params=pltpu.CompilerParams(
            dimension_semantics=("parallel",),
            vmem_limit_bytes=vmem_limit,
        ),
    )(x3, scale[:, None], shift[:, None], w_l, conv_b.astype(f32)[:, None], mask)

    return out3.reshape(N, C, H, W)


def _reference(x_nchw, gamma, beta, conv_w, conv_b, eps=1e-5):
    mean = jnp.mean(x_nchw, axis=(0, 2, 3), keepdims=True)
    var = jnp.var(x_nchw, axis=(0, 2, 3), keepdims=True)
    y = (x_nchw - mean) / jnp.sqrt(var + eps)
    y = y * gamma[None, :, None, None] + beta[None, :, None, None]
    y = jnp.maximum(y, 0.0)
    z = lax.conv_general_dilated(
        y, conv_w, window_strides=(1, 1), padding="SAME",
        dimension_numbers=("NCHW", "OIHW", "NCHW"),
    )
    z = z + conv_b[None, :, None, None]
    return x_nchw + z


if __name__ == "__main__":
    key = jax.random.PRNGKey(0)
    kx, kw_, kb = jax.random.split(key, 3)

    N, C, H, W = 2, 4, 16, 16
    x = jax.random.normal(kx, (N, C, H, W), dtype=jnp.float32)

    # Deterministic parameter init (shapes per nn.BatchNorm2d(c) and nn.Conv2d(c, c, 3)).
    gamma = jnp.ones((C,), jnp.float32)      # BN weight
    beta = jnp.zeros((C,), jnp.float32)      # BN bias
    conv_w = 0.1 * jax.random.normal(kw_, (C, C, 3, 3), dtype=jnp.float32)
    conv_b = 0.1 * jax.random.normal(kb, (C,), dtype=jnp.float32)

    out = jax.block_until_ready(preact_resnet_block(x, gamma, beta, conv_w, conv_b))
    ref = jax.block_until_ready(_reference(x, gamma, beta, conv_w, conv_b))

    assert out.shape == (N, C, H, W)
    # Tolerance sized for MXU pass-decomposition of the f32 tap matmul vs. XLA's conv.
    assert jnp.allclose(out, ref, rtol=5e-3, atol=5e-3), "mismatch vs reference"

    print("KERNEL_OK")
</pallas_src>

<mosaic_0001>
module attributes {stable_mosaic.version = 11 : i64} {
  func.func @kernel(%arg0: i32, %arg1: memref<1x4x256xf32, #tpu.memory_space<vmem>>, %arg2: memref<4x1xf32, #tpu.memory_space<vmem>>, %arg3: memref<4x1xf32, #tpu.memory_space<vmem>>, %arg4: memref<8x72xf32, #tpu.memory_space<vmem>>, %arg5: memref<4x1xf32, #tpu.memory_space<vmem>>, %arg6: memref<9x4x256xf32, #tpu.memory_space<vmem>>, %arg7: memref<1x4x256xf32, #tpu.memory_space<vmem>>, %arg8: memref<72x256xf32, #tpu.memory_space<vmem>>) attributes {dimension_semantics = [#tpu.dimension_semantics<parallel>], iteration_bounds = array<i64: 2>, scalar_prefetch = 0 : i64, scratch_operands = 1 : i64, tpu.core_type = #tpu.core_type<tc>, window_params = [{transform_indices = @transform_0, window_bounds = array<i64: 1, 4, 256>}, {pipeline_mode = #tpu.pipeline_mode<synchronous>, transform_indices = @transform_1, window_bounds = array<i64: 4, 1>}, {pipeline_mode = #tpu.pipeline_mode<synchronous>, transform_indices = @transform_2, window_bounds = array<i64: 4, 1>}, {pipeline_mode = #tpu.pipeline_mode<synchronous>, transform_indices = @transform_3, window_bounds = array<i64: 8, 72>}, {pipeline_mode = #tpu.pipeline_mode<synchronous>, transform_indices = @transform_4, window_bounds = array<i64: 4, 1>}, {pipeline_mode = #tpu.pipeline_mode<synchronous>, transform_indices = @transform_5, window_bounds = array<i64: 9, 4, 256>}, {transform_indices = @transform_6, window_bounds = array<i64: 1, 4, 256>}]} {
    %c0 = arith.constant 0 : index
    %c0_0 = arith.constant 0 : index
    %0 = vector.load %arg2[%c0, %c0_0] : memref<4x1xf32, #tpu.memory_space<vmem>>, vector<4x1xf32>
    %1 = vector.shape_cast %0 : vector<4x1xf32> to vector<4x1xf32>
    %2 = vector.broadcast %1 : vector<4x1xf32> to vector<4x256xf32>
    %c0_1 = arith.constant 0 : index
    %c0_2 = arith.constant 0 : index
    %3 = vector.load %arg3[%c0_1, %c0_2] : memref<4x1xf32, #tpu.memory_space<vmem>>, vector<4x1xf32>
    %4 = vector.shape_cast %3 : vector<4x1xf32> to vector<4x1xf32>
    %5 = vector.broadcast %4 : vector<4x1xf32> to vector<4x256xf32>
    %c0_3 = arith.constant 0 : index
    %c0_4 = arith.constant 0 : index
    %6 = vector.load %arg5[%c0_3, %c0_4] : memref<4x1xf32, #tpu.memory_space<vmem>>, vector<4x1xf32>
    %7 = vector.shape_cast %6 : vector<4x1xf32> to vector<4x1xf32>
    %8 = vector.broadcast %7 : vector<4x1xf32> to vector<4x256xf32>
    %c0_5 = arith.constant 0 : index
    %c0_6 = arith.constant 0 : index
    %9 = vector.load %arg4[%c0_5, %c0_6] : memref<8x72xf32, #tpu.memory_space<vmem>>, vector<8x72xf32>
    %cst = arith.constant 0.000000e+00 : f32
    %10 = vector.broadcast %cst : f32 to vector<4x256xf32>
    %c4 = arith.constant 4 : index
    %c0_7 = arith.constant 0 : index
    %11 = vector.load %arg8[%c4, %c0_7] : memref<72x256xf32, #tpu.memory_space<vmem>>, vector<4x256xf32>
    tpu.vector_store %arg8[%c4, %c0_7], %10 {strides = array<i32>} : memref<72x256xf32, #tpu.memory_space<vmem>>, vector<4x256xf32>,
    %c12 = arith.constant 12 : index
    %c0_8 = arith.constant 0 : index
    %12 = vector.load %arg8[%c12, %c0_8] : memref<72x256xf32, #tpu.memory_space<vmem>>, vector<4x256xf32>
    tpu.vector_store %arg8[%c12, %c0_8], %10 {strides = array<i32>} : memref<72x256xf32, #tpu.memory_space<vmem>>, vector<4x256xf32>,
    %c20 = arith.constant 20 : index
    %c0_9 = arith.constant 0 : index
    %13 = vector.load %arg8[%c20, %c0_9] : memref<72x256xf32, #tpu.memory_space<vmem>>, vector<4x256xf32>
    tpu.vector_store %arg8[%c20, %c0_9], %10 {strides = array<i32>} : memref<72x256xf32, #tpu.memory_space<vmem>>, vector<4x256xf32>,
    %c28 = arith.constant 28 : index
    %c0_10 = arith.constant 0 : index
    %14 = vector.load %arg8[%c28, %c0_10] : memref<72x256xf32, #tpu.memory_space<vmem>>, vector<4x256xf32>
    tpu.vector_store %arg8[%c28, %c0_10], %10 {strides = array<i32>} : memref<72x256xf32, #tpu.memory_space<vmem>>, vector<4x256xf32>,
    %c36 = arith.constant 36 : index
    %c0_11 = arith.constant 0 : index
    %15 = vector.load %arg8[%c36, %c0_11] : memref<72x256xf32, #tpu.memory_space<vmem>>, vector<4x256xf32>
    tpu.vector_store %arg8[%c36, %c0_11], %10 {strides = array<i32>} : memref<72x256xf32, #tpu.memory_space<vmem>>, vector<4x256xf32>,
    %c44 = arith.constant 44 : index
    %c0_12 = arith.constant 0 : index
    %16 = vector.load %arg8[%c44, %c0_12] : memref<72x256xf32, #tpu.memory_space<vmem>>, vector<4x256xf32>
    tpu.vector_store %arg8[%c44, %c0_12], %10 {strides = array<i32>} : memref<72x256xf32, #tpu.memory_space<vmem>>, vector<4x256xf32>,
    %c52 = arith.constant 52 : index
    %c0_13 = arith.constant 0 : index
    %17 = vector.load %arg8[%c52, %c0_13] : memref<72x256xf32, #tpu.memory_space<vmem>>, vector<4x256xf32>
    tpu.vector_store %arg8[%c52, %c0_13], %10 {strides = array<i32>} : memref<72x256xf32, #tpu.memory_space<vmem>>, vector<4x256xf32>,
    %c60 = arith.constant 60 : index
    %c0_14 = arith.constant 0 : index
    %18 = vector.load %arg8[%c60, %c0_14] : memref<72x256xf32, #tpu.memory_space<vmem>>, vector<4x256xf32>
    tpu.vector_store %arg8[%c60, %c0_14], %10 {strides = array<i32>} : memref<72x256xf32, #tpu.memory_space<vmem>>, vector<4x256xf32>,
    %c68 = arith.constant 68 : index
    %c0_15 = arith.constant 0 : index
    %19 = vector.load %arg8[%c68, %c0_15] : memref<72x256xf32, #tpu.memory_space<vmem>>, vector<4x256xf32>
    tpu.vector_store %arg8[%c68, %c0_15], %10 {strides = array<i32>} : memref<72x256xf32, #tpu.memory_space<vmem>>, vector<4x256xf32>,
    %c0_i32 = arith.constant 0 : i32
    %c1_i32 = arith.constant 1 : i32
    %20 = arith.muli %c0_i32, %c1_i32 : i32
    %c0_i32_16 = arith.constant 0 : i32
    %21 = arith.addi %c0_i32_16, %20 : i32
    %22 = arith.index_cast %21 : i32 to index
    %c0_17 = arith.constant 0 : index
    %c0_18 = arith.constant 0 : index
    %23 = vector.load %arg1[%22, %c0_17, %c0_18] : memref<1x4x256xf32, #tpu.memory_space<vmem>>, vector<1x4x256xf32>
    %24 = vector.shape_cast %23 : vector<1x4x256xf32> to vector<4x256xf32>
    %25 = arith.mulf %24, %2 : vector<4x256xf32>
    %26 = arith.addf %25, %5 : vector<4x256xf32>
    %cst_19 = arith.constant 0.000000e+00 : f32
    %27 = vector.broadcast %cst_19 : f32 to vector<4x256xf32>
    %28 = arith.maximumf %26, %27 : vector<4x256xf32>
    %c17_i32 = arith.constant 17 : i32
    %29 = tpu.dynamic_rotate %28 by %c17_i32 dim 1 : vector<4x256xf32>, i32 -> vector<4x256xf32>
    %c0_20 = arith.constant 0 : index
    %c0_21 = arith.constant 0 : index
    %c0_22 = arith.constant 0 : index
    %30 = vector.load %arg6[%c0_20, %c0_21, %c0_22] : memref<9x4x256xf32, #tpu.memory_space<vmem>>, vector<1x4x256xf32>
    %31 = vector.shape_cast %30 : vector<1x4x256xf32> to vector<4x256xf32>
    %32 = arith.mulf %29, %31 : vector<4x256xf32>
    %c0_23 = arith.constant 0 : index
    %c0_24 = arith.constant 0 : index
    %33 = vector.load %arg8[%c0_23, %c0_24] : memref<72x256xf32, #tpu.memory_space<vmem>>, vector<4x256xf32>
    tpu.vector_store %arg8[%c0_23, %c0_24], %32 {strides = array<i32>} : memref<72x256xf32, #tpu.memory_space<vmem>>, vector<4x256xf32>,
    %c16_i32 = arith.constant 16 : i32
    %34 = tpu.dynamic_rotate %28 by %c16_i32 dim 1 : vector<4x256xf32>, i32 -> vector<4x256xf32>
    %c1 = arith.constant 1 : index
    %c0_25 = arith.constant 0 : index
    %c0_26 = arith.constant 0 : index
    %35 = vector.load %arg6[%c1, %c0_25, %c0_26] : memref<9x4x256xf32, #tpu.memory_space<vmem>>, vector<1x4x256xf32>
    %36 = vector.shape_cast %35 : vector<1x4x256xf32> to vector<4x256xf32>
    %37 = arith.mulf %34, %36 : vector<4x256xf32>
    %c8 = arith.constant 8 : index
    %c0_27 = arith.constant 0 : index
    %38 = vector.load %arg8[%c8, %c0_27] : memref<72x256xf32, #tpu.memory_space<vmem>>, vector<4x256xf32>
    tpu.vector_store %arg8[%c8, %c0_27], %37 {strides = array<i32>} : memref<72x256xf32, #tpu.memory_space<vmem>>, vector<4x256xf32>,
    %c15_i32 = arith.constant 15 : i32
    %39 = tpu.dynamic_rotate %28 by %c15_i32 dim 1 : vector<4x256xf32>, i32 -> vector<4x256xf32>
    %c2 = arith.constant 2 : index
    %c0_28 = arith.constant 0 : index
    %c0_29 = arith.constant 0 : index
    %40 = vector.load %arg6[%c2, %c0_28, %c0_29] : memref<9x4x256xf32, #tpu.memory_space<vmem>>, vector<1x4x256xf32>
    %41 = vector.shape_cast %40 : vector<1x4x256xf32> to vector<4x256xf32>
    %42 = arith.mulf %39, %41 : vector<4x256xf32>
    %c16 = arith.constant 16 : index
    %c0_30 = arith.constant 0 : index
    %43 = vector.load %arg8[%c16, %c0_30] : memref<72x256xf32, #tpu.memory_space<vmem>>, vector<4x256xf32>
    tpu.vector_store %arg8[%c16, %c0_30], %42 {strides = array<i32>} : memref<72x256xf32, #tpu.memory_space<vmem>>, vector<4x256xf32>,
    %c1_i32_31 = arith.constant 1 : i32
    %44 = tpu.dynamic_rotate %28 by %c1_i32_31 dim 1 : vector<4x256xf32>, i32 -> vector<4x256xf32>
    %c3 = arith.constant 3 : index
    %c0_32 = arith.constant 0 : index
    %c0_33 = arith.constant 0 : index
    %45 = vector.load %arg6[%c3, %c0_32, %c0_33] : memref<9x4x256xf32, #tpu.memory_space<vmem>>, vector<1x4x256xf32>
    %46 = vector.shape_cast %45 : vector<1x4x256xf32> to vector<4x256xf32>
    %47 = arith.mulf %44, %46 : vector<4x256xf32>
    %c24 = arith.constant 24 : index
    %c0_34 = arith.constant 0 : index
    %48 = vector.load %arg8[%c24, %c0_34] : memref<72x256xf32, #tpu.memory_space<vmem>>, vector<4x256xf32>
    tpu.vector_store %arg8[%c24, %c0_34], %47 {strides = array<i32>} : memref<72x256xf32, #tpu.memory_space<vmem>>, vector<4x256xf32>,
    %c32 = arith.constant 32 : index
    %c0_35 = arith.constant 0 : index
    %49 = vector.load %arg8[%c32, %c0_35] : memref<72x256xf32, #tpu.memory_space<vmem>>, vector<4x256xf32>
    tpu.vector_store %arg8[%c32, %c0_35], %28 {strides = array<i32>} : memref<72x256xf32, #tpu.memory_space<vmem>>, vector<4x256xf32>,
    %c255_i32 = arith.constant 255 : i32
    %50 = tpu.dynamic_rotate %28 by %c255_i32 dim 1 : vector<4x256xf32>, i32 -> vector<4x256xf32>
    %c5 = arith.constant 5 : index
    %c0_36 = arith.constant 0 : index
    %c0_37 = arith.constant 0 : index
    %51 = vector.load %arg6[%c5, %c0_36, %c0_37] : memref<9x4x256xf32, #tpu.memory_space<vmem>>, vector<1x4x256xf32>
    %52 = vector.shape_cast %51 : vector<1x4x256xf32> to vector<4x256xf32>
    %53 = arith.mulf %50, %52 : vector<4x256xf32>
    %c40 = arith.constant 40 : index
    %c0_38 = arith.constant 0 : index
    %54 = vector.load %arg8[%c40, %c0_38] : memref<72x256xf32, #tpu.memory_space<vmem>>, vector<4x256xf32>
    tpu.vector_store %arg8[%c40, %c0_38], %53 {strides = array<i32>} : memref<72x256xf32, #tpu.memory_space<vmem>>, vector<4x256xf32>,
    %c241_i32 = arith.constant 241 : i32
    %55 = tpu.dynamic_rotate %28 by %c241_i32 dim 1 : vector<4x256xf32>, i32 -> vector<4x256xf32>
    %c6 = arith.constant 6 : index
    %c0_39 = arith.constant 0 : index
    %c0_40 = arith.constant 0 : index
    %56 = vector.load %arg6[%c6, %c0_39, %c0_40] : memref<9x4x256xf32, #tpu.memory_space<vmem>>, vector<1x4x256xf32>
    %57 = vector.shape_cast %56 : vector<1x4x256xf32> to vector<4x256xf32>
    %58 = arith.mulf %55, %57 : vector<4x256xf32>
    %c48 = arith.constant 48 : index
    %c0_41 = arith.constant 0 : index
    %59 = vector.load %arg8[%c48, %c0_41] : memref<72x256xf32, #tpu.memory_space<vmem>>, vector<4x256xf32>
    tpu.vector_store %arg8[%c48, %c0_41], %58 {strides = array<i32>} : memref<72x256xf32, #tpu.memory_space<vmem>>, vector<4x256xf32>,
    %c240_i32 = arith.constant 240 : i32
    %60 = tpu.dynamic_rotate %28 by %c240_i32 dim 1 : vector<4x256xf32>, i32 -> vector<4x256xf32>
    %c7 = arith.constant 7 : index
    %c0_42 = arith.constant 0 : index
    %c0_43 = arith.constant 0 : index
    %61 = vector.load %arg6[%c7, %c0_42, %c0_43] : memref<9x4x256xf32, #tpu.memory_space<vmem>>, vector<1x4x256xf32>
    %62 = vector.shape_cast %61 : vector<1x4x256xf32> to vector<4x256xf32>
    %63 = arith.mulf %60, %62 : vector<4x256xf32>
    %c56 = arith.constant 56 : index
    %c0_44 = arith.constant 0 : index
    %64 = vector.load %arg8[%c56, %c0_44] : memref<72x256xf32, #tpu.memory_space<vmem>>, vector<4x256xf32>
    tpu.vector_store %arg8[%c56, %c0_44], %63 {strides = array<i32>} : memref<72x256xf32, #tpu.memory_space<vmem>>, vector<4x256xf32>,
    %c239_i32 = arith.constant 239 : i32
    %65 = tpu.dynamic_rotate %28 by %c239_i32 dim 1 : vector<4x256xf32>, i32 -> vector<4x256xf32>
    %c8_45 = arith.constant 8 : index
    %c0_46 = arith.constant 0 : index
    %c0_47 = arith.constant 0 : index
    %66 = vector.load %arg6[%c8_45, %c0_46, %c0_47] : memref<9x4x256xf32, #tpu.memory_space<vmem>>, vector<1x4x256xf32>
    %67 = vector.shape_cast %66 : vector<1x4x256xf32> to vector<4x256xf32>
    %68 = arith.mulf %65, %67 : vector<4x256xf32>
    %c64 = arith.constant 64 : index
    %c0_48 = arith.constant 0 : index
    %69 = vector.load %arg8[%c64, %c0_48] : memref<72x256xf32, #tpu.memory_space<vmem>>, vector<4x256xf32>
    tpu.vector_store %arg8[%c64, %c0_48], %68 {strides = array<i32>} : memref<72x256xf32, #tpu.memory_space<vmem>>, vector<4x256xf32>,
    %c0_49 = arith.constant 0 : index
    %c0_50 = arith.constant 0 : index
    %70 = vector.load %arg8[%c0_49, %c0_50] : memref<72x256xf32, #tpu.memory_space<vmem>>, vector<72x256xf32>
    %cst_51 = arith.constant dense<0.000000e+00> : vector<8x256xf32>
    %71 = tpu.matmul %9, %70, %cst_51 {dimension_numbers = #tpu.dot_dimension_numbers<[1], [0], [0], [1], [0, 0, 1, 1], [], []>} : vector<8x72xf32>, vector<72x256xf32>, vector<8x256xf32> -> vector<8x256xf32>
    %72 = vector.extract_strided_slice %71 {offsets = [0, 0], sizes = [4, 256], strides = [1, 1]} : vector<8x256xf32> to vector<4x256xf32>
    %73 = arith.addf %72, %8 : vector<4x256xf32>
    %74 = arith.addf %73, %24 : vector<4x256xf32>
    %75 = arith.index_cast %21 : i32 to index
    %c0_52 = arith.constant 0 : index
    %c0_53 = arith.constant 0 : index
    %76 = vector.load %arg7[%75, %c0_52, %c0_53] : memref<1x4x256xf32, #tpu.memory_space<vmem>>, vector<1x4x256xf32>
    %77 = vector.shape_cast %76 : vector<1x4x256xf32> to vector<4x256xf32>
    %78 = vector.shape_cast %74 : vector<4x256xf32> to vector<1x4x256xf32>
    tpu.vector_store %arg7[%75, %c0_52, %c0_53], %78 {strides = array<i32>} : memref<1x4x256xf32, #tpu.memory_space<vmem>>, vector<1x4x256xf32>,
    %c1_i32_54 = arith.constant 1 : i32
    return
  }
  func.func @transform_0(%arg0: i32) -> (i32, i32, i32) {
    %c0_i32 = arith.constant 0 : i32
    %c0_i32_0 = arith.constant 0 : i32
    %c0_i32_1 = arith.constant 0 : i32
    return %arg0, %c0_i32, %c0_i32_0 : i32, i32, i32
  }
  func.func @transform_1(%arg0: i32) -> (i32, i32) {
    %c0_i32 = arith.constant 0 : i32
    %c0_i32_0 = arith.constant 0 : i32
    %c0_i32_1 = arith.constant 0 : i32
    return %c0_i32, %c0_i32_0 : i32, i32
  }
  func.func @transform_2(%arg0: i32) -> (i32, i32) {
    %c0_i32 = arith.constant 0 : i32
    %c0_i32_0 = arith.constant 0 : i32
    %c0_i32_1 = arith.constant 0 : i32
    return %c0_i32, %c0_i32_0 : i32, i32
  }
  func.func @transform_3(%arg0: i32) -> (i32, i32) {
    %c0_i32 = arith.constant 0 : i32
    %c0_i32_0 = arith.constant 0 : i32
    %c0_i32_1 = arith.constant 0 : i32
    return %c0_i32, %c0_i32_0 : i32, i32
  }
  func.func @transform_4(%arg0: i32) -> (i32, i32) {
    %c0_i32 = arith.constant 0 : i32
    %c0_i32_0 = arith.constant 0 : i32
    %c0_i32_1 = arith.constant 0 : i32
    return %c0_i32, %c0_i32_0 : i32, i32
  }
  func.func @transform_5(%arg0: i32) -> (i32, i32, i32) {
    %c0_i32 = arith.constant 0 : i32
    %c0_i32_0 = arith.constant 0 : i32
    %c0_i32_1 = arith.constant 0 : i32
    %c0_i32_2 = arith.constant 0 : i32
    return %c0_i32, %c0_i32_0, %c0_i32_1 : i32, i32, i32
  }
  func.func @transform_6(%arg0: i32) -> (i32, i32, i32) {
    %c0_i32 = arith.constant 0 : i32
    %c0_i32_0 = arith.constant 0 : i32
    %c0_i32_1 = arith.constant 0 : i32
    return %arg0, %c0_i32, %c0_i32_0 : i32, i32, i32
  }
}

</mosaic_0001>

<llo_original>
// kernel: tpu_custom_call.1
$region0: #{tpu_custom_call.1}
  #allocation0 [shape = 'u32[]', space=smem, size = 0x4, offset = 0x4, fixed_abs, tag = 'smem constant byte address 0x4 - core index']
  #allocation1 [shape = 'u32[72,128]{1,0:T(1,128)}', space=vmem, size = 0x9000, scoped, tag = 'internal scratch']
  #allocation2 [shape = 'f32[72,256]{1,0:T(8,128)}', space=vmem, size = 0x12000, scoped, tag = 'scratch operand']
  %s0 = inlined_call_operand.hbm [shape: f32[2,4,256], index: 0, kind: input, shape index: {}]
  %s1 = inlined_call_operand.vmem [shape: f32[4,1], index: 1, kind: input, shape index: {}]
  %s2 = inlined_call_operand.vmem [shape: f32[4,1], index: 2, kind: input, shape index: {}]
  %s3 = inlined_call_operand.vmem [shape: f32[8,72], index: 3, kind: input, shape index: {}]
  %s4 = inlined_call_operand.vmem [shape: f32[4,1], index: 4, kind: input, shape index: {}]
  %s5 = inlined_call_operand.hbm [shape: f32[9,4,256], index: 5, kind: input, shape index: {}]
  %s6 = inlined_call_operand.hbm [shape: f32[2,4,256], index: 6, kind: output, shape index: {}]
  %s7 = sld [smem:[#allocation0]]
  $region65: #{tpu_custom_call.1} parent=0
    _
  %s9 = ssub.s32 1, %s7
  %s10 = scalar_select 0, %s9, %s7
  $region1: #{tpu_custom_call.1} parent=0
    #allocation3 [shape = 'u8[8192]{0}', space=vmem, size = 0x2000, scoped, tag = 'input window, operand 0']
    #allocation4 [shape = 's32[2]{0}', space=sflag, size = 0x8, scoped, tag = 'scoped memory for tpu_custom_call.1']
    #allocation5 [shape = 's32[2]{0}', space=sflag, size = 0x8, scoped, tag = 'scoped memory for tpu_custom_call.1']
    #allocation6 [shape = 'u8[36864]{0}', space=vmem, size = 0x9000, scoped, tag = 'input window, operand 5, single buffered']
    #allocation7 [shape = 's32[1]{0}', space=sflag, size = 0x4, scoped, tag = 'scoped memory for tpu_custom_call.1']
    #allocation8 [shape = 'u8[8192]{0}', space=vmem, size = 0x2000, scoped, tag = 'output window, operand 0']
    %11 = vsyncpa [#allocation4], 0
    %s12 = scalar_lea.sflag [#allocation4], 1
    %13 = vsyncpa %s12, 0
    %14 = vsyncpa [#allocation7], 0
    %15 = vsyncpa [#allocation5], 0
    %s16 = scalar_lea.sflag [#allocation5], 1
    %17 = vsyncpa %s16, 0
    loop: start=0, step=1, limit=4
    $region2: #{tpu_custom_call.1} parent=1 // loop_pre_header
      _
    $region3: #{tpu_custom_call.1} parent=1 // loop_header
      %s19 = sphi 0, %s23
      %p20 = scmp.ge.s32.totalorder %s19, 4
      %s29 = sphi 0, %s31
      %s32 = sphi 0, %s29
      %s33 = sphi 0, %s32
      %s49 = sphi 0, %s33
      %s53 = sphi 0, %s53
      %s55 = sphi 0, %s53
      %s56 = sphi 0, %s55
      %s70 = sphi 0, %s56
      %s74 = sphi 0, %s74
      %s76 = sphi 0, %s74
      %s77 = sphi 0, %s76
      %s91 = sphi 0, %s77
      %s95 = sphi 0, %s95
      %s97 = sphi 0, %s95
      %s98 = sphi 0, %s97
      %s112 = sphi 0, %s98
      %s116 = sphi 0, %s116
      %s118 = sphi 0, %s116
      %s119 = sphi 0, %s118
      %s133 = sphi 0, %s119
      %s137 = sphi 0, %s137
      %s139 = sphi 0, %s137
      %s140 = sphi 0, %s139
      %s154 = sphi 0, %s140
      %s160 = sphi 0, %s162
      %s163 = sphi 0, %s160
      %s164 = sphi 0, %s163
      %s180 = sphi 0, %s164
    $region4: #{tpu_custom_call.1} parent=1 // loop_header_branch
      %22 = sbr.rel (%p20) target = $region8
    $region5: #{tpu_custom_call.1} parent=1 // loop_body
      %s24 = ssub.s32 %s19, 1
      %s25 = ssub.s32 %s19, 2
      %s26 = sadd.s32 %s19, 1
      %s27 = ssub.s32 %s19, %s26
      %p28 = scmp.eq.s32.totalorder %s27, 0
      %s30 = sadd.s32 %s29, 1
      %s31 = scalar_select %p28, %s29, %s30
      %p34 = pneg %p28
      %p35 = scmp.eq.s32.totalorder %s19, 1
      %p36 = por %p34, %p35
      %p37 = scmp.ne.s32.totalorder %s29, %s32
      %p38 = scmp.eq.s32.totalorder %s19, 0
      %p39 = por %p37, %p38
      %p40 = scmp.ne.s32.totalorder %s29, %s32
      %p41 = scmp.eq.s32.totalorder %s24, 1
      %p42 = por %p40, %p41
      %p43 = scmp.ne.s32.totalorder %s32, %s33
      %p44 = scmp.eq.s32.totalorder %s24, 0
      %p45 = por %p43, %p44
      %p46 = scmp.ne.s32.totalorder %s32, %s33
      %p47 = scmp.eq.s32.totalorder %s25, 1
      %p48 = por %p46, %p47
      %p50 = scmp.ne.s32.totalorder %s33, %s49
      %p51 = scmp.eq.s32.totalorder %s25, 0
      %p52 = por %p50, %p51
      %s54 = sadd.s32 %s53, 1
      %p57 = scmp.eq.s32.totalorder %s19, 1
      %p58 = scmp.ne.s32.totalorder %s53, %s55
      %p59 = scmp.eq.s32.totalorder %s19, 0
      %p60 = por %p58, %p59
      %p61 = scmp.ne.s32.totalorder %s53, %s55
      %p62 = scmp.eq.s32.totalorder %s24, 1
      %p63 = por %p61, %p62
      %p64 = scmp.ne.s32.totalorder %s55, %s56
      %p65 = scmp.eq.s32.totalorder %s24, 0
      %p66 = por %p64, %p65
      %p67 = scmp.ne.s32.totalorder %s55, %s56
      %p68 = scmp.eq.s32.totalorder %s25, 1
      %p69 = por %p67, %p68
      %p71 = scmp.ne.s32.totalorder %s56, %s70
      %p72 = scmp.eq.s32.totalorder %s25, 0
      %p73 = por %p71, %p72
      %s75 = sadd.s32 %s74, 1
      %p78 = scmp.eq.s32.totalorder %s19, 1
      %p79 = scmp.ne.s32.totalorder %s74, %s76
      %p80 = scmp.eq.s32.totalorder %s19, 0
      %p81 = por %p79, %p80
      %p82 = scmp.ne.s32.totalorder %s74, %s76
      %p83 = scmp.eq.s32.totalorder %s24, 1
      %p84 = por %p82, %p83
      %p85 = scmp.ne.s32.totalorder %s76, %s77
      %p86 = scmp.eq.s32.totalorder %s24, 0
      %p87 = por %p85, %p86
      %p88 = scmp.ne.s32.totalorder %s76, %s77
      %p89 = scmp.eq.s32.totalorder %s25, 1
      %p90 = por %p88, %p89
      %p92 = scmp.ne.s32.totalorder %s77, %s91
      %p93 = scmp.eq.s32.totalorder %s25, 0
      %p94 = por %p92, %p93
      %s96 = sadd.s32 %s95, 1
      %p99 = scmp.eq.s32.totalorder %s19, 1
      %p100 = scmp.ne.s32.totalorder %s95, %s97
      %p101 = scmp.eq.s32.totalorder %s19, 0
      %p102 = por %p100, %p101
      %p103 = scmp.ne.s32.totalorder %s95, %s97
      %p104 = scmp.eq.s32.totalorder %s24, 1
      %p105 = por %p103, %p104
      %p106 = scmp.ne.s32.totalorder %s97, %s98
      %p107 = scmp.eq.s32.totalorder %s24, 0
      %p108 = por %p106, %p107
      %p109 = scmp.ne.s32.totalorder %s97, %s98
      %p110 = scmp.eq.s32.totalorder %s25, 1
      %p111 = por %p109, %p110
      %p113 = scmp.ne.s32.totalorder %s98, %s112
      %p114 = scmp.eq.s32.totalorder %s25, 0
      %p115 = por %p113, %p114
      %s117 = sadd.s32 %s116, 1
      %p120 = scmp.eq.s32.totalorder %s19, 1
      %p121 = scmp.ne.s32.totalorder %s116, %s118
      %p122 = scmp.eq.s32.totalorder %s19, 0
      %p123 = por %p121, %p122
      %p124 = scmp.ne.s32.totalorder %s116, %s118
      %p125 = scmp.eq.s32.totalorder %s24, 1
      %p126 = por %p124, %p125
      %p127 = scmp.ne.s32.totalorder %s118, %s119
      %p128 = scmp.eq.s32.totalorder %s24, 0
      %p129 = por %p127, %p128
      %p130 = scmp.ne.s32.totalorder %s118, %s119
      %p131 = scmp.eq.s32.totalorder %s25, 1
      %p132 = por %p130, %p131
      %p134 = scmp.ne.s32.totalorder %s119, %s133
      %p135 = scmp.eq.s32.totalorder %s25, 0
      %p136 = por %p134, %p135
      %s138 = sadd.s32 %s137, 1
      %p141 = scmp.eq.s32.totalorder %s19, 1
      %p142 = scmp.ne.s32.totalorder %s137, %s139
      %p143 = scmp.eq.s32.totalorder %s19, 0
      %p144 = por %p142, %p143
      %p145 = scmp.ne.s32.totalorder %s137, %s139
      %p146 = scmp.eq.s32.totalorder %s24, 1
      %p147 = por %p145, %p146
      %p148 = scmp.ne.s32.totalorder %s139, %s140
      %p149 = scmp.eq.s32.totalorder %s24, 0
      %p150 = por %p148, %p149
      %p151 = scmp.ne.s32.totalorder %s139, %s140
      %p152 = scmp.eq.s32.totalorder %s25, 1
      %p153 = por %p151, %p152
      %p155 = scmp.ne.s32.totalorder %s140, %s154
      %p156 = scmp.eq.s32.totalorder %s25, 0
      %p157 = por %p155, %p156
      %s158 = ssub.s32 %s19, %s26
      %p159 = scmp.eq.s32.totalorder %s158, 0
      %s161 = sadd.s32 %s160, 1
      %s162 = scalar_select %p159, %s160, %s161
      %p165 = pneg %p159
      %p166 = scmp.eq.s32.totalorder %s19, 1
      %p167 = por %p165, %p166
      %p168 = scmp.ne.s32.totalorder %s160, %s163
      %p169 = scmp.eq.s32.totalorder %s19, 0
      %p170 = por %p168, %p169
      %p171 = scmp.ne.s32.totalorder %s160, %s163
      %p172 = scmp.eq.s32.totalorder %s24, 1
      %p173 = por %p171, %p172
      %p174 = scmp.ne.s32.totalorder %s163, %s164
      %p175 = scmp.eq.s32.totalorder %s24, 0
      %p176 = por %p174, %p175
      %p177 = scmp.ne.s32.totalorder %s163, %s164
      %p178 = scmp.eq.s32.totalorder %s25, 1
      %p179 = por %p177, %p178
      %p181 = scmp.ne.s32.totalorder %s164, %s180
      %p182 = scmp.eq.s32.totalorder %s25, 0
      %p183 = por %p181, %p182
      %p184 = scmp.le.s32.totalorder 1, %s19
      %p185 = scmp.lt.s32.totalorder %s19, 3
      %p186 = pnand %p184, %p185
      %p187 = pneg %p186
      // Predicated region
      $region9: #{tpu_custom_call.1} parent=5 // pred_check
        _
      $region10: #{tpu_custom_call.1} parent=5 // pred_check_branch
        %189 = sbr.rel (%p186) target = $region12
      $region11: #{tpu_custom_call.1} parent=5 // pred_region
        %s190 = ssub.s32 %s19, 1
        // Predicated region
        $region13: #{tpu_custom_call.1} parent=11 // pred_check
          %p191 = pneg %p66
        $region14: #{tpu_custom_call.1} parent=11 // pred_check_branch
          %193 = sbr.rel (%p191) target = $region16
        $region15: #{tpu_custom_call.1} parent=11 // pred_region
          _
        $region16: #{tpu_custom_call.1} parent=11 // pred_fallthru
          _
        // Predicated region
        $region17: #{tpu_custom_call.1} parent=11 // pred_check
          %p194 = pneg %p87
        $region18: #{tpu_custom_call.1} parent=11 // pred_check_branch
          %196 = sbr.rel (%p194) target = $region20
        $region19: #{tpu_custom_call.1} parent=11 // pred_region
          _
        $region20: #{tpu_custom_call.1} parent=11 // pred_fallthru
          _
        // Predicated region
        $region21: #{tpu_custom_call.1} parent=11 // pred_check
          %p197 = pneg %p108
        $region22: #{tpu_custom_call.1} parent=11 // pred_check_branch
          %199 = sbr.rel (%p197) target = $region24
        $region23: #{tpu_custom_call.1} parent=11 // pred_region
          _
        $region24: #{tpu_custom_call.1} parent=11 // pred_fallthru
          _
        // Predicated region
        $region25: #{tpu_custom_call.1} parent=11 // pred_check
          %p200 = pneg %p129
        $region26: #{tpu_custom_call.1} parent=11 // pred_check_branch
          %202 = sbr.rel (%p200) target = $region28
        $region27: #{tpu_custom_call.1} parent=11 // pred_region
          _
        $region28: #{tpu_custom_call.1} parent=11 // pred_fallthru
          _
        // Predicated region
        $region29: #{tpu_custom_call.1} parent=11 // pred_check
          %p203 = pneg %p150
        $region30: #{tpu_custom_call.1} parent=11 // pred_check_branch
          %205 = sbr.rel (%p203) target = $region32
        $region31: #{tpu_custom_call.1} parent=11 // pred_region
          %207 = vsyncadd [#allocation7], 0
          %s208 = sshll.u32 %s5, 4
          %s209 = int_to_ptr.hbm [resolvable:$true] %s208
          %s210 = sshll.u32 [#allocation6], 4
          %s211 = int_to_ptr.vmem [resolvable:$true] %s210
          %216 = dma.hbm_to_vmem [thread:$0]  %s209, 1152, %s211, [#allocation7], 128, 128, 8
        $region32: #{tpu_custom_call.1} parent=11 // pred_fallthru
          _
      $region12: #{tpu_custom_call.1} parent=5 // pred_fallthru
        _
      %p217 = scmp.lt.s32.totalorder %s19, 2
      // Predicated region
      $region33: #{tpu_custom_call.1} parent=5 // pred_check
        %p218 = pneg %p217
      $region34: #{tpu_custom_call.1} parent=5 // pred_check_branch
        %220 = sbr.rel (%p218) target = $region36
      $region35: #{tpu_custom_call.1} parent=5 // pred_region
        // Predicated region
        $region37: #{tpu_custom_call.1} parent=35 // pred_check
          %p221 = pneg %p39
        $region38: #{tpu_custom_call.1} parent=35 // pred_check_branch
          %223 = sbr.rel (%p221) target = $region40
        $region39: #{tpu_custom_call.1} parent=35 // pred_region
          %s224 = sand.u32 %s29, 1
          %s225 = scalar_lea.sflag [#allocation4], %s224
          %s226 = sand.u32 %s29, 1
          %s227 = smul.addr %s226, 8
          %s228 = scalar_lea.vmem [#allocation3], %s227
          %230 = vsyncadd %s225, 0
          %s231 = smul.addr %s19, 2
          %s232 = smul.addr %s231, 4
          %s233 = scalar_lea.hbm %s0, %s232
          %s235 = sshll.u32 %s233, 4
          %s236 = int_to_ptr.hbm [resolvable:$true] %s235
          %s237 = sshll.u32 %s228, 4
          %s238 = int_to_ptr.vmem [resolvable:$true] %s237
          %240 = dma.hbm_to_vmem [thread:$0]  %s236, 128, %s238, %s225
        $region40: #{tpu_custom_call.1} parent=35 // pred_fallthru
          _
      $region36: #{tpu_custom_call.1} parent=5 // pred_fallthru
        _
      %p241 = scmp.le.s32.totalorder 1, %s19
      %p242 = scmp.lt.s32.totalorder %s19, 3
      %p243 = pnand %p241, %p242
      %p244 = pneg %p243
      // Predicated region
      $region41: #{tpu_custom_call.1} parent=5 // pred_check
        _
      $region42: #{tpu_custom_call.1} parent=5 // pred_check_branch
        %246 = sbr.rel (%p243) target = $region44
      $region43: #{tpu_custom_call.1} parent=5 // pred_region
        %s247 = ssub.s32 %s19, 1
        %s248 = sand.u32 %s32, 1
        %s249 = scalar_lea.sflag [#allocation4], %s248
        %s250 = sand.u32 %s32, 1
        %s251 = smul.addr %s250, 8
        %s252 = scalar_lea.vmem [#allocation3], %s251
        // Predicated region
        $region45: #{tpu_custom_call.1} parent=43 // pred_check
          %p253 = pneg %p45
        $region46: #{tpu_custom_call.1} parent=43 // pred_check_branch
          %255 = sbr.rel (%p253) target = $region48
        $region47: #{tpu_custom_call.1} parent=43 // pred_region
          %257 = dma.done %s249, 128
        $region48: #{tpu_custom_call.1} parent=43 // pred_fallthru
          _
        // Predicated region
        $region49: #{tpu_custom_call.1} parent=43 // pred_check
          %p258 = pneg %p150
        $region50: #{tpu_custom_call.1} parent=43 // pred_check_branch
          %260 = sbr.rel (%p258) target = $region52
        $region51: #{tpu_custom_call.1} parent=43 // pred_region
          %262 = dma.done [#allocation7], 1152
        $region52: #{tpu_custom_call.1} parent=43 // pred_fallthru
          _
        %s263 = sand.u32 %s32, 1
        %s264 = scalar_lea.sflag [#allocation4], %s263
        %s265 = sand.u32 %s32, 1
        %s266 = smul.addr %s265, 8
        %s267 = scalar_lea.vmem [#allocation3], %s266
        %p268 = pneg %p45
        %p269 = pneg %p42
        %p270 = pneg %p66
        %p271 = pneg %p63
        %p272 = pneg %p87
        %p273 = pneg %p84
        %p274 = pneg %p108
        %p275 = pneg %p105
        %p276 = pneg %p129
        %p277 = pneg %p126
        %p278 = pneg %p150
        %p279 = pneg %p147
        %p280 = pneg %p176
        %p281 = pneg %p173
        %s282 = sand.u32 %s163, 1
        %s283 = scalar_lea.sflag [#allocation5], %s282
        %s284 = sand.u32 %s163, 1
        %s285 = smul.addr %s284, 8
        %s286 = scalar_lea.vmem [#allocation8], %s285
        %v287 = vld [vmem:[%s1] sm:$0xf]
        %289 = vset.pattern.permute.xlu0 0
        %290 = vperm.xlu0 %289, %v287
        %v291 = vpop.permute.xlu0 %290
        %v292 = vld [vmem:[%s2] sm:$0xf]
        %294 = vset.pattern.permute.xlu0 0
        %295 = vperm.xlu0 %294, %v292
        %v296 = vpop.permute.xlu0 %295
        %v297 = vld [vmem:[%s4] sm:$0xf]
        %299 = vset.pattern.permute.xlu0 0
        %300 = vperm.xlu0 %299, %v297
        %v301 = vpop.permute.xlu0 %300
        %v303 = vld [vmem:[%s3] sm:$0xff]
        %304 = vst [vmem:[#allocation2] sm:$0xf0] 0.0
        %305 = vst [vmem:[#allocation2 + $0x8] sm:$0xf0] 0.0
        %306 = vst [vmem:[#allocation2 + $0x10] sm:$0xf0] 0.0
        %307 = vst [vmem:[#allocation2 + $0x18] sm:$0xf0] 0.0
        %308 = vst [vmem:[#allocation2 + $0x20] sm:$0xf0] 0.0
        %309 = vst [vmem:[#allocation2 + $0x28] sm:$0xf0] 0.0
        %310 = vst [vmem:[#allocation2 + $0x30] sm:$0xf0] 0.0
        %311 = vst [vmem:[#allocation2 + $0x38] sm:$0xf0] 0.0
        %312 = vst [vmem:[#allocation2 + $0x40] sm:$0xf0] 0.0
        %313 = vst [vmem:[#allocation2 + $0x48] sm:$0xf0] 0.0
        %314 = vst [vmem:[#allocation2 + $0x50] sm:$0xf0] 0.0
        %315 = vst [vmem:[#allocation2 + $0x58] sm:$0xf0] 0.0
        %316 = vst [vmem:[#allocation2 + $0x60] sm:$0xf0] 0.0
        %317 = vst [vmem:[#allocation2 + $0x68] sm:$0xf0] 0.0
        %318 = vst [vmem:[#allocation2 + $0x70] sm:$0xf0] 0.0
        %319 = vst [vmem:[#allocation2 + $0x78] sm:$0xf0] 0.0
        %320 = vst [vmem:[#allocation2 + $0x80] sm:$0xf0] 0.0
        %321 = vst [vmem:[#allocation2 + $0x88] sm:$0xf0] 0.0
        %v322 = vld [vmem:[%s252] sm:$0xff]
        %v324 = vunpack.c.l.s4 839922192
        %v325 = vunpack.c.0.s8 %v324
        %v326 = vperm.slane %v291, %v325
        %v328 = vmul.f32 %v322, %v326
        %v330 = vunpack.c.l.s4 839922192
        %v331 = vunpack.c.0.s8 %v330
        %v332 = vperm.slane %v296, %v331
        %v334 = vadd.f32 %v328, %v332
        %v335 = vmax.f32 %v334, 0.0
        %337 = vst [vmem:[#allocation1] ss:$2 sm:$0xff] %v335
        %v338 = vld.sshfl [vmem:[#allocation1] sm:$0xff pattern:$0x75316420]
        %v339 = vld.sshfl [vmem:[#allocation1 + $0x8] sm:$0xff pattern:$0x75316420]
        %342 = vrot.lane.b32.xlu0 %v338, 17
        %v343 = vpop.permute.xlu0 %342
        %344 = vrot.lane.b32.xlu0 %v339, 17
        %v345 = vpop.permute.xlu0 %344
        %v346 = vlaneseq
        %v347 = vand.u32 %v346, 127
        %vm348 = vcmp.lt.s32.totalorder %v347, 17
        %v349 = vsel %vm348, %v343, %v345
        %v350 = vsel %vm348, %v345, %v343
        %v351 = vld [vmem:[#allocation6] sm:$0xff]
        %353 = vst [vmem:[#allocation1] ss:$2 sm:$0xff] %v351
        %v354 = vld.sshfl [vmem:[#allocation1] sm:$0xff pattern:$0x75316420]
        %v355 = vld.sshfl [vmem:[#allocation1 + $0x8] sm:$0xff pattern:$0x75316420]
        %v358 = vmul.f32 %v350, %v354
        %v359 = vmul.f32 %v349, %v355
        %360 = vst [vmem:[#allocation2] sm:$0xf] %v358
        %361 = vst [vmem:[#allocation2 + $0x8] sm:$0xf] %v359
        %362 = vst [vmem:[#allocation1] ss:$2 sm:$0xff] %v335
        %v363 = vld.sshfl [vmem:[#allocation1] sm:$0xff pattern:$0x75316420]
        %v364 = vld.sshfl [vmem:[#allocation1 + $0x8] sm:$0xff pattern:$0x75316420]
        %367 = vrot.lane.b32.xlu0 %v363, 16
        %v368 = vpop.permute.xlu0 %367
        %369 = vrot.lane.b32.xlu0 %v364, 16
        %v370 = vpop.permute.xlu0 %369
        %vm371 = vcmp.lt.s32.totalorder %v347, 16
        %v372 = vsel %vm371, %v368, %v370
        %v373 = vsel %vm371, %v370, %v368
        %s374 = scalar_lea.vmem [#allocation6], 8
        %v375 = vld [vmem:[%s374] sm:$0xff]
        %377 = vst [vmem:[#allocation1] ss:$2 sm:$0xff] %v375
        %v378 = vld.sshfl [vmem:[#allocation1] sm:$0xff pattern:$0x75316420]
        %v379 = vld.sshfl [vmem:[#allocation1 + $0x8] sm:$0xff pattern:$0x75316420]
        %v382 = vmul.f32 %v373, %v378
        %v383 = vmul.f32 %v372, %v379
        %384 = vst [vmem:[#allocation2 + $0x10] sm:$0xf] %v382
        %385 = vst [vmem:[#allocation2 + $0x18] sm:$0xf] %v383
        %386 = vst [vmem:[#allocation1] ss:$2 sm:$0xff] %v335
        %v387 = vld.sshfl [vmem:[#allocation1] sm:$0xff pattern:$0x75316420]
        %v388 = vld.sshfl [vmem:[#allocation1 + $0x8] sm:$0xff pattern:$0x75316420]
        %391 = vrot.lane.b32.xlu0 %v387, 15
        %v392 = vpop.permute.xlu0 %391
        %393 = vrot.lane.b32.xlu0 %v388, 15
        %v394 = vpop.permute.xlu0 %393
        %vm395 = vcmp.lt.s32.totalorder %v347, 15
        %v396 = vsel %vm395, %v392, %v394
        %v397 = vsel %vm395, %v394, %v392
        %s398 = scalar_lea.vmem [#allocation6], 16
        %v399 = vld [vmem:[%s398] sm:$0xff]
        %401 = vst [vmem:[#allocation1] ss:$2 sm:$0xff] %v399
        %v402 = vld.sshfl [vmem:[#allocation1] sm:$0xff pattern:$0x75316420]
        %v403 = vld.sshfl [vmem:[#allocation1 + $0x8] sm:$0xff pattern:$0x75316420]
        %v406 = vmul.f32 %v397, %v402
        %v407 = vmul.f32 %v396, %v403
        %408 = vst [vmem:[#allocation2 + $0x20] sm:$0xf] %v406
        %409 = vst [vmem:[#allocation2 + $0x28] sm:$0xf] %v407
        %410 = vst [vmem:[#allocation1] ss:$2 sm:$0xff] %v335
        %v411 = vld.sshfl [vmem:[#allocation1] sm:$0xff pattern:$0x75316420]
        %v412 = vld.sshfl [vmem:[#allocation1 + $0x8] sm:$0xff pattern:$0x75316420]
        %415 = vrot.lane.b32.xlu0 %v411, 1
        %v416 = vpop.permute.xlu0 %415
        %417 = vrot.lane.b32.xlu0 %v412, 1
        %v418 = vpop.permute.xlu0 %417
        %vm419 = vcmp.lt.s32.totalorder %v347, 1
        %v420 = vsel %vm419, %v416, %v418
        %v421 = vsel %vm419, %v418, %v416
        %s422 = scalar_lea.vmem [#allocation6], 24
        %v423 = vld [vmem:[%s422] sm:$0xff]
        %425 = vst [vmem:[#allocation1] ss:$2 sm:$0xff] %v423
        %v426 = vld.sshfl [vmem:[#allocation1] sm:$0xff pattern:$0x75316420]
        %v427 = vld.sshfl [vmem:[#allocation1 + $0x8] sm:$0xff pattern:$0x75316420]
        %v430 = vmul.f32 %v421, %v426
        %v431 = vmul.f32 %v420, %v427
        %432 = vst [vmem:[#allocation2 + $0x30] sm:$0xf] %v430
        %433 = vst [vmem:[#allocation2 + $0x38] sm:$0xf] %v431
        %434 = vst [vmem:[#allocation1] ss:$2 sm:$0xff] %v335
        %v435 = vld.sshfl [vmem:[#allocation1] sm:$0xff pattern:$0x75316420]
        %v436 = vld.sshfl [vmem:[#allocation1 + $0x8] sm:$0xff pattern:$0x75316420]
        %439 = vst [vmem:[#allocation2 + $0x40] sm:$0xf] %v435
        %440 = vst [vmem:[#allocation2 + $0x48] sm:$0xf] %v436
        %441 = vst [vmem:[#allocation1] ss:$2 sm:$0xff] %v335
        %v442 = vld.sshfl [vmem:[#allocation1] sm:$0xff pattern:$0x75316420]
        %v443 = vld.sshfl [vmem:[#allocation1 + $0x8] sm:$0xff pattern:$0x75316420]
        %446 = vrot.lane.b32.xlu0 %v442, 127
        %v447 = vpop.permute.xlu0 %446
        %448 = vrot.lane.b32.xlu0 %v443, 127
        %v449 = vpop.permute.xlu0 %448
        %vm450 = vcmp.lt.s32.totalorder %v347, 127
        %v451 = vsel %vm450, %v447, %v449
        %v452 = vsel %vm450, %v449, %v447
        %s453 = scalar_lea.vmem [#allocation6], 40
        %v454 = vld [vmem:[%s453] sm:$0xff]
        %456 = vst [vmem:[#allocation1] ss:$2 sm:$0xff] %v454
        %v457 = vld.sshfl [vmem:[#allocation1] sm:$0xff pattern:$0x75316420]
        %v458 = vld.sshfl [vmem:[#allocation1 + $0x8] sm:$0xff pattern:$0x75316420]
        %v461 = vmul.f32 %v451, %v457
        %v462 = vmul.f32 %v452, %v458
        %463 = vst [vmem:[#allocation2 + $0x50] sm:$0xf] %v461
        %464 = vst [vmem:[#allocation2 + $0x58] sm:$0xf] %v462
        %465 = vst [vmem:[#allocation1] ss:$2 sm:$0xff] %v335
        %v466 = vld.sshfl [vmem:[#allocation1] sm:$0xff pattern:$0x75316420]
        %v467 = vld.sshfl [vmem:[#allocation1 + $0x8] sm:$0xff pattern:$0x75316420]
        %470 = vrot.lane.b32.xlu0 %v466, 113
        %v471 = vpop.permute.xlu0 %470
        %472 = vrot.lane.b32.xlu0 %v467, 113
        %v473 = vpop.permute.xlu0 %472
        %vm474 = vcmp.lt.s32.totalorder %v347, 113
        %v475 = vsel %vm474, %v471, %v473
        %v476 = vsel %vm474, %v473, %v471
        %s477 = scalar_lea.vmem [#allocation6], 48
        %v478 = vld [vmem:[%s477] sm:$0xff]
        %480 = vst [vmem:[#allocation1] ss:$2 sm:$0xff] %v478
        %v481 = vld.sshfl [vmem:[#allocation1] sm:$0xff pattern:$0x75316420]
        %v482 = vld.sshfl [vmem:[#allocation1 + $0x8] sm:$0xff pattern:$0x75316420]
        %v485 = vmul.f32 %v475, %v481
        %v486 = vmul.f32 %v476, %v482
        %487 = vst [vmem:[#allocation2 + $0x60] sm:$0xf] %v485
        %488 = vst [vmem:[#allocation2 + $0x68] sm:$0xf] %v486
        %489 = vst [vmem:[#allocation1] ss:$2 sm:$0xff] %v335
        %v490 = vld.sshfl [vmem:[#allocation1] sm:$0xff pattern:$0x75316420]
        %v491 = vld.sshfl [vmem:[#allocation1 + $0x8] sm:$0xff pattern:$0x75316420]
        %494 = vrot.lane.b32.xlu0 %v490, 112
        %v495 = vpop.permute.xlu0 %494
        %496 = vrot.lane.b32.xlu0 %v491, 112
        %v497 = vpop.permute.xlu0 %496
        %vm498 = vcmp.lt.s32.totalorder %v347, 112
        %v499 = vsel %vm498, %v495, %v497
        %v500 = vsel %vm498, %v497, %v495
        %s501 = scalar_lea.vmem [#allocation6], 56
        %v502 = vld [vmem:[%s501] sm:$0xff]
        %504 = vst [vmem:[#allocation1] ss:$2 sm:$0xff] %v502
        %v505 = vld.sshfl [vmem:[#allocation1] sm:$0xff pattern:$0x75316420]
        %v506 = vld.sshfl [vmem:[#allocation1 + $0x8] sm:$0xff pattern:$0x75316420]
        %v509 = vmul.f32 %v499, %v505
        %v510 = vmul.f32 %v500, %v506
        %511 = vst [vmem:[#allocation2 + $0x70] sm:$0xf] %v509
        %512 = vst [vmem:[#allocation2 + $0x78] sm:$0xf] %v510
        %513 = vst [vmem:[#allocation1] ss:$2 sm:$0xff] %v335
        %v514 = vld.sshfl [vmem:[#allocation1] sm:$0xff pattern:$0x75316420]
        %v515 = vld.sshfl [vmem:[#allocation1 + $0x8] sm:$0xff pattern:$0x75316420]
        %518 = vrot.lane.b32.xlu0 %v514, 111
        %v519 = vpop.permute.xlu0 %518
        %520 = vrot.lane.b32.xlu0 %v515, 111
        %v521 = vpop.permute.xlu0 %520
        %vm522 = vcmp.lt.s32.totalorder %v347, 111
        %v523 = vsel %vm522, %v519, %v521
        %v524 = vsel %vm522, %v521, %v519
        %s525 = scalar_lea.vmem [#allocation6], 64
        %v526 = vld [vmem:[%s525] sm:$0xff]
        %528 = vst [vmem:[#allocation1] ss:$2 sm:$0xff] %v526
        %v529 = vld.sshfl [vmem:[#allocation1] sm:$0xff pattern:$0x75316420]
        %v530 = vld.sshfl [vmem:[#allocation1 + $0x8] sm:$0xff pattern:$0x75316420]
        %v533 = vmul.f32 %v523, %v529
        %v534 = vmul.f32 %v524, %v530
        %535 = vst [vmem:[#allocation2 + $0x80] sm:$0xf] %v533
        %536 = vst [vmem:[#allocation2 + $0x88] sm:$0xf] %v534
        %v537 = vld [vmem:[#allocation2] sm:$0xff]
        %v538 = vld [vmem:[#allocation2 + $0x8] sm:$0xff]
        %v539 = vld [vmem:[#allocation2 + $0x10] sm:$0xff]
        %v540 = vld [vmem:[#allocation2 + $0x18] sm:$0xff]
        %v541 = vld [vmem:[#allocation2 + $0x20] sm:$0xff]
        %v542 = vld [vmem:[#allocation2 + $0x28] sm:$0xff]
        %v543 = vld [vmem:[#allocation2 + $0x30] sm:$0xff]
        %v544 = vld [vmem:[#allocation2 + $0x38] sm:$0xff]
        %v545 = vld [vmem:[#allocation2 + $0x40] sm:$0xff]
        %v546 = vld [vmem:[#allocation2 + $0x48] sm:$0xff]
        %v547 = vld [vmem:[#allocation2 + $0x50] sm:$0xff]
        %v548 = vld [vmem:[#allocation2 + $0x58] sm:$0xff]
        %v549 = vld [vmem:[#allocation2 + $0x60] sm:$0xff]
        %v550 = vld [vmem:[#allocation2 + $0x68] sm:$0xff]
        %v551 = vld [vmem:[#allocation2 + $0x70] sm:$0xff]
        %v552 = vld [vmem:[#allocation2 + $0x78] sm:$0xff]
        %v553 = vld [vmem:[#allocation2 + $0x80] sm:$0xff]
        %v554 = vld [vmem:[#allocation2 + $0x88] sm:$0xff]
        %vm555 = vcmask 588800
        %v557 = vsel %vm555, %v303, 0
        %559 = vmatpush.msra.mxu0 0.0
        %560 = vmatpush.msra.mxu0 0.0
        %561 = vmatpush.msra.mxu0 0.0
        %562 = vmatpush.msra.mxu0 0.0
        %563 = vmatpush.msra.mxu0 0.0
        %564 = vmatpush.msra.mxu0 0.0
        %565 = vmatpush.msra.mxu0 0.0
        %566 = vmatpush.msra.mxu0 %v553
        %567 = vmatpush.msra.mxu0 %v551
        %568 = vmatpush.msra.mxu0 %v549
        %569 = vmatpush.msra.mxu0 %v547
        %570 = vmatpush.msra.mxu0 %v545
        %571 = vmatpush.msra.mxu0 %v543
        %572 = vmatpush.msra.mxu0 %v541
        %573 = vmatpush.msra.mxu0 %v539
        %574 = vmatpush.msra.mxu0 %v537
        %575 = vmatmul.f32.gmra.mxu0 %v557
        %v576 = vpop.f32.mrf.mxu0
        %v577 = vadd.f32 0.0, %v576
        %578 = vdwg.mxu0
        %579 = vmatpush.msra.mxu0 0.0
        %580 = vmatpush.msra.mxu0 0.0
        %581 = vmatpush.msra.mxu0 0.0
        %582 = vmatpush.msra.mxu0 0.0
        %583 = vmatpush.msra.mxu0 0.0
        %584 = vmatpush.msra.mxu0 0.0
        %585 = vmatpush.msra.mxu0 0.0
        %586 = vmatpush.msra.mxu0 %v554
        %587 = vmatpush.msra.mxu0 %v552
        %588 = vmatpush.msra.mxu0 %v550
        %589 = vmatpush.msra.mxu0 %v548
        %590 = vmatpush.msra.mxu0 %v546
        %591 = vmatpush.msra.mxu0 %v544
        %592 = vmatpush.msra.mxu0 %v542
        %593 = vmatpush.msra.mxu0 %v540
        %594 = vmatpush.msra.mxu0 %v538
        %595 = vmatmul.f32.gmra.mxu0 %v557
        %v596 = vpop.f32.mrf.mxu0
        %v597 = vadd.f32 0.0, %v596
        %598 = vdwg.mxu0
        %v599 = vadd.f32 %v577, %v301
        %v600 = vadd.f32 %v597, %v301
        %602 = vst [vmem:[#allocation1] ss:$2 sm:$0xff] %v322
        %v603 = vld.sshfl [vmem:[#allocation1] sm:$0xff pattern:$0x75316420]
        %v604 = vld.sshfl [vmem:[#allocation1 + $0x8] sm:$0xff pattern:$0x75316420]
        %v607 = vadd.f32 %v599, %v603
        %v608 = vadd.f32 %v600, %v604
        %v611 = vrot.slane %v608, 4
        %vm612 = vcmask 1043456
        %v613 = vsel %vm612, %v607, %v611
        %615 = vst [vmem:[%s286] sm:$0xff] %v613
        %s616 = sand.u32 %s163, 1
        %s617 = scalar_lea.sflag [#allocation5], %s616
        %s618 = sand.u32 %s163, 1
        %s619 = smul.addr %s618, 8
        %s620 = scalar_lea.vmem [#allocation8], %s619
        // Predicated region
        $region53: #{tpu_custom_call.1} parent=43 // pred_check
          %p621 = pneg %p173
        $region54: #{tpu_custom_call.1} parent=43 // pred_check_branch
          %623 = sbr.rel (%p621) target = $region56
        $region55: #{tpu_custom_call.1} parent=43 // pred_region
          %625 = vsyncadd %s617, 0
          %s626 = smul.addr %s24, 2
          %s627 = smul.addr %s626, 4
          %s628 = scalar_lea.hbm %s6, %s627
          %s630 = sshll.u32 %s620, 4
          %s631 = int_to_ptr.vmem [resolvable:$true] %s630
          %s632 = sshll.u32 %s628, 4
          %s633 = int_to_ptr.hbm [resolvable:$true] %s632
          %635 = dma.vmem_to_hbm [thread:$0]  %s631, 128, %s633, %s617
        $region56: #{tpu_custom_call.1} parent=43 // pred_fallthru
          _
      $region44: #{tpu_custom_call.1} parent=5 // pred_fallthru
        _
      %p636 = scmp.le.s32.totalorder 2, %s19
      // Predicated region
      $region57: #{tpu_custom_call.1} parent=5 // pred_check
        %p637 = pneg %p636
      $region58: #{tpu_custom_call.1} parent=5 // pred_check_branch
        %639 = sbr.rel (%p637) target = $region60
      $region59: #{tpu_custom_call.1} parent=5 // pred_region
        %s640 = ssub.s32 %s19, 2
        // Predicated region
        $region61: #{tpu_custom_call.1} parent=59 // pred_check
          %p641 = pneg %p179
        $region62: #{tpu_custom_call.1} parent=59 // pred_check_branch
          %643 = sbr.rel (%p641) target = $region64
        $region63: #{tpu_custom_call.1} parent=59 // pred_region
          %s644 = sand.u32 %s164, 1
          %s645 = scalar_lea.sflag [#allocation5], %s644
          %s646 = sand.u32 %s164, 1
          %s647 = smul.addr %s646, 8
          %s648 = scalar_lea.vmem [#allocation8], %s647
          %650 = dma.done %s645, 128
        $region64: #{tpu_custom_call.1} parent=59 // pred_fallthru
          _
      $region60: #{tpu_custom_call.1} parent=5 // pred_fallthru
        _
    $region6: #{tpu_custom_call.1} parent=1 // loop_footer
      %s23 = sadd.s32 1, %s19
    $region7: #{tpu_custom_call.1} parent=1 // loop_footer_branch
      %18 = sbr.rel target = $region3
    $region8: #{tpu_custom_call.1} parent=1 // loop_exit
      _
    %651 = vsyncpa [#allocation4], 1
    %s652 = scalar_lea.sflag [#allocation4], 1
    %653 = vsyncpa %s652, 1
    %654 = vsyncpa [#allocation7], 1
    %655 = vsyncpa [#allocation5], 1
    %s656 = scalar_lea.sflag [#allocation5], 1
    %657 = vsyncpa %s656, 1

</llo_original>
